<compile_context>
chip_gen: v6e
topology: v6e:2x2x1
jax: 0.10.0
libtpu: 0.0.40
codegen_flags: <defaults>
</compile_context>

<pallas_src>
import jax
import jax.numpy as jnp
from jax.experimental import pallas as pl
from jax.experimental.pallas import tpu as pltpu


def _round_up(n, m):
    return ((n + m - 1) // m) * m


def affine_flow_kernel(scal_ref,              # SMEM (1, 3): [s_scale, s_shift, n_free]
                       xt_ref,                # VMEM (D, TB): x^T tile, batch on lanes
                       inv_mask_ref,          # VMEM (D, 1):  (1 - mask) column, resident
                       w12t_ref, b12t_ref,    # VMEM (H, D), (H, 1): fused (mask*W1)@W2
                       w3t_ref, b3t_ref,      # VMEM (2, H), (2, 1): output Linear
                       yt_ref, logdet_ref):   # VMEM (D, TB), (1, TB)
    xt = xt_ref[...]                                              # (D, TB)

    # Fused conditioner MLP: relu(W12^T @ x^T + b12^T)  -> one MXU matmul instead of two.
    h2 = jnp.dot(w12t_ref[...], xt,
                 preferred_element_type=jnp.float32) + b12t_ref[...]   # (H, TB)
    h2 = jnp.maximum(h2, 0.0)

    out = jnp.dot(w3t_ref[...], h2,
                  preferred_element_type=jnp.float32) + b3t_ref[...]   # (2, TB)
    log_s_row = out[0:1, :]                                       # (1, TB)  (chunk 0)
    t_row = out[1:2, :]                                           # (1, TB)  (chunk 1)

    s_scale = scal_ref[0, 0]
    s_shift = scal_ref[0, 1]
    n_free = scal_ref[0, 2]                                       # = sum(1 - mask)

    log_s_row = jnp.tanh(log_s_row) * s_scale + s_shift           # (1, TB)

    inv_mask = inv_mask_ref[...]                                  # (D, 1)
    log_s = log_s_row * inv_mask                                  # (D, TB) broadcast
    yt_ref[...] = xt * jnp.exp(log_s) + t_row * inv_mask          # (D, TB), lane-dense
    # Exact closed form: sum_d log_s_row*inv_mask[d] = log_s_row * sum_d inv_mask[d].
    logdet_ref[...] = log_s_row * n_free                          # (1, TB), lane-dense


def affine_flow_forward(x, mask, params, *, block_b=1024):
    """x: (B, D) f32; mask: (D,) f32; params: MLP weights (stored (in,out)) + s_scale/s_shift."""
    B, D = x.shape
    H = params["w1"].shape[1]

    # Batch tile rides the 128-wide lane axis -> multiple of 128.
    TB = min(_round_up(block_b, 128), _round_up(B, 128))
    Bp = _round_up(B, TB)
    nb = Bp // TB

    x = x.astype(jnp.float32)
    mask_f = mask.astype(jnp.float32).reshape(D)
    inv_mask_col = (1.0 - mask_f).reshape(D, 1)

    # Fold mask + Linear1 into Linear2 (no activation between them in FCNN): exact algebra.
    w12 = (mask_f[:, None] * params["w1"]) @ params["w2"]          # (D, H)
    b12 = params["b1"].reshape(1, H) @ params["w2"] + params["b2"].reshape(1, H)

    w12t = w12.T                                                   # (H, D)
    b12t = b12.reshape(H, 1)                                       # (H, 1)
    w3t = params["w3"].T                                           # (2, H)
    b3t = params["b3"].reshape(2, 1)                               # (2, 1)

    scal = jnp.stack([params["s_scale"].reshape(()),
                      params["s_shift"].reshape(()),
                      jnp.sum(1.0 - mask_f)]).reshape(1, 3).astype(jnp.float32)

    # Transposed working layout (batch on lanes); pad batch to a multiple of TB.
    xt = x.T                                                       # (D, B)
    if Bp != B:
        xt = jnp.pad(xt, ((0, 0), (0, Bp - B)))

    smem_spec = pl.BlockSpec(memory_space=pltpu.MemorySpace.SMEM)
    const = lambda i: (0, 0)

    yt, logdet2d = pl.pallas_call(
        affine_flow_kernel,
        out_shape=(
            jax.ShapeDtypeStruct((D, Bp), jnp.float32),
            jax.ShapeDtypeStruct((1, Bp), jnp.float32),
        ),
        grid=(nb,),
        in_specs=[
            smem_spec,                                      # scalars
            pl.BlockSpec((D, TB), lambda i: (0, i)),        # x^T tile (pipelined)
            pl.BlockSpec((D, 1), const),                    # inv_mask column (resident)
            pl.BlockSpec((H, D), const),                    # W12^T (resident)
            pl.BlockSpec((H, 1), const),                    # b12^T (resident)
            pl.BlockSpec((2, H), const),                    # W3^T (resident)
            pl.BlockSpec((2, 1), const),                    # b3^T (resident)
        ],
        out_specs=(
            pl.BlockSpec((D, TB), lambda i: (0, i)),        # y^T tile
            pl.BlockSpec((1, TB), lambda i: (0, i)),        # logdet tile
        ),
        compiler_params=pltpu.CompilerParams(
            dimension_semantics=("parallel",)),
    )(scal, xt, inv_mask_col, w12t, b12t, w3t, b3t)

    y = yt[:, :B].T                                         # back to (B, D)
    logdet = logdet2d[0, :B]                                 # (B,)
    return y, logdet


def init_params(key, n_dim, hidden_size):
    """Deterministic synthetic init (shapes from FCNN(n_dim, H, 2 hidden layers, 2))."""
    k1, k2, k3, k4, k5, k6 = jax.random.split(key, 6)
    scale = 0.1
    return {
        "w1": scale * jax.random.normal(k1, (n_dim, hidden_size), jnp.float32),
        "b1": scale * jax.random.normal(k2, (1, hidden_size), jnp.float32),
        "w2": scale * jax.random.normal(k3, (hidden_size, hidden_size), jnp.float32),
        "b2": scale * jax.random.normal(k4, (1, hidden_size), jnp.float32),
        "w3": scale * jax.random.normal(k5, (hidden_size, 2), jnp.float32),
        "b3": scale * jax.random.normal(k6, (1, 2), jnp.float32),
        "s_scale": jnp.ones((1,), jnp.float32),    # nn.Parameter(torch.ones(1))
        "s_shift": jnp.zeros((1,), jnp.float32),   # nn.Parameter(torch.zeros(1))
    }


def reference_forward(x, mask, params):
    """Pure-JAX reference mirroring the PyTorch module (unfused), for a sanity check."""
    xm = x * mask
    h1 = xm @ params["w1"] + params["b1"]
    h2 = jnp.maximum(h1 @ params["w2"] + params["b2"], 0.0)
    out = h2 @ params["w3"] + params["b3"]
    log_s = jnp.tanh(out[:, 0:1]) * params["s_scale"][0] + params["s_shift"][0]
    t = out[:, 1:2] * (1.0 - mask)
    log_s = log_s * (1.0 - mask)
    y = x * jnp.exp(log_s) + t
    return y, log_s.sum(axis=1)


if __name__ == "__main__":
    B, D, H = 1000, 4, 32                    # batch=1000 (pads to 1024), n_dim=4, hidden=32
    key = jax.random.PRNGKey(0)
    kx, kp = jax.random.split(key)

    x = jax.random.normal(kx, (B, D), jnp.float32)
    mask = jnp.array([1.0, 0.0, 1.0, 0.0], jnp.float32)   # alternating coupling mask
    params = init_params(kp, D, H)

    # block_b=256 -> grid of 4 tiles: exercises pipelining, weight residency and padding.
    y, logdet = affine_flow_forward(x, mask, params, block_b=256)
    jax.block_until_ready((y, logdet))

    y_ref, logdet_ref = reference_forward(x, mask.reshape(1, D), params)
    assert jnp.allclose(y, y_ref, atol=1e-4, rtol=1e-4), float(jnp.max(jnp.abs(y - y_ref)))
    assert jnp.allclose(logdet, logdet_ref, atol=1e-4, rtol=1e-4), \
        float(jnp.max(jnp.abs(logdet - logdet_ref)))

    print("KERNEL_OK")
</pallas_src>

<mosaic_0001>
module attributes {stable_mosaic.version = 11 : i64} {
  func.func @affine_flow_kernel(%arg0: i32, %arg1: memref<1x3xf32, #tpu.memory_space<smem>>, %arg2: memref<4x256xf32, #tpu.memory_space<vmem>>, %arg3: memref<4x1xf32, #tpu.memory_space<vmem>>, %arg4: memref<32x4xf32, #tpu.memory_space<vmem>>, %arg5: memref<32x1xf32, #tpu.memory_space<vmem>>, %arg6: memref<2x32xf32, #tpu.memory_space<vmem>>, %arg7: memref<2x1xf32, #tpu.memory_space<vmem>>, %arg8: memref<4x256xf32, #tpu.memory_space<vmem>>, %arg9: memref<1x256xf32, #tpu.memory_space<vmem>>) attributes {dimension_semantics = [#tpu.dimension_semantics<parallel>], iteration_bounds = array<i64: 4>, scalar_prefetch = 0 : i64, scratch_operands = 0 : i64, tpu.core_type = #tpu.core_type<tc>, window_params = [{transform_indices = @transform_0, window_bounds = array<i64: 1, 3>}, {transform_indices = @transform_1, window_bounds = array<i64: 4, 256>}, {pipeline_mode = #tpu.pipeline_mode<synchronous>, transform_indices = @transform_2, window_bounds = array<i64: 4, 1>}, {pipeline_mode = #tpu.pipeline_mode<synchronous>, transform_indices = @transform_3, window_bounds = array<i64: 32, 4>}, {pipeline_mode = #tpu.pipeline_mode<synchronous>, transform_indices = @transform_4, window_bounds = array<i64: 32, 1>}, {pipeline_mode = #tpu.pipeline_mode<synchronous>, transform_indices = @transform_5, window_bounds = array<i64: 2, 32>}, {pipeline_mode = #tpu.pipeline_mode<synchronous>, transform_indices = @transform_6, window_bounds = array<i64: 2, 1>}, {transform_indices = @transform_7, window_bounds = array<i64: 4, 256>}, {transform_indices = @transform_8, window_bounds = array<i64: 1, 256>}]} {
    %c0 = arith.constant 0 : index
    %c0_0 = arith.constant 0 : index
    %0 = vector.load %arg2[%c0, %c0_0] : memref<4x256xf32, #tpu.memory_space<vmem>>, vector<4x256xf32>
    %c0_1 = arith.constant 0 : index
    %c0_2 = arith.constant 0 : index
    %1 = vector.load %arg4[%c0_1, %c0_2] : memref<32x4xf32, #tpu.memory_space<vmem>>, vector<32x4xf32>
    %cst = arith.constant dense<0.000000e+00> : vector<32x256xf32>
    %2 = tpu.matmul %1, %0, %cst {dimension_numbers = #tpu.dot_dimension_numbers<[1], [0], [0], [1], [0, 0, 1, 1], [], []>} : vector<32x4xf32>, vector<4x256xf32>, vector<32x256xf32> -> vector<32x256xf32>
    %c0_3 = arith.constant 0 : index
    %c0_4 = arith.constant 0 : index
    %3 = vector.load %arg5[%c0_3, %c0_4] : memref<32x1xf32, #tpu.memory_space<vmem>>, vector<32x1xf32>
    %4 = vector.broadcast %3 : vector<32x1xf32> to vector<32x256xf32>
    %5 = arith.addf %2, %4 : vector<32x256xf32>
    %cst_5 = arith.constant 0.000000e+00 : f32
    %6 = vector.broadcast %cst_5 : f32 to vector<32x256xf32>
    %7 = arith.maximumf %5, %6 : vector<32x256xf32>
    %c0_6 = arith.constant 0 : index
    %c0_7 = arith.constant 0 : index
    %8 = vector.load %arg6[%c0_6, %c0_7] : memref<2x32xf32, #tpu.memory_space<vmem>>, vector<2x32xf32>
    %cst_8 = arith.constant dense<0.000000e+00> : vector<2x256xf32>
    %9 = tpu.matmul %8, %7, %cst_8 {dimension_numbers = #tpu.dot_dimension_numbers<[1], [0], [0], [1], [0, 0, 1, 1], [], []>} : vector<2x32xf32>, vector<32x256xf32>, vector<2x256xf32> -> vector<2x256xf32>
    %c0_9 = arith.constant 0 : index
    %c0_10 = arith.constant 0 : index
    %10 = vector.load %arg7[%c0_9, %c0_10] : memref<2x1xf32, #tpu.memory_space<vmem>>, vector<2x1xf32>
    %11 = vector.broadcast %10 : vector<2x1xf32> to vector<2x256xf32>
    %12 = arith.addf %9, %11 : vector<2x256xf32>
    %13 = vector.extract_strided_slice %12 {offsets = [0, 0], sizes = [1, 256], strides = [1, 1]} : vector<2x256xf32> to vector<1x256xf32>
    %14 = vector.extract_strided_slice %12 {offsets = [1, 0], sizes = [1, 256], strides = [1, 1]} : vector<2x256xf32> to vector<1x256xf32>
    %c0_11 = arith.constant 0 : index
    %c0_12 = arith.constant 0 : index
    %15 = memref.load %arg1[%c0_11, %c0_12] : memref<1x3xf32, #tpu.memory_space<smem>>
    %c0_13 = arith.constant 0 : index
    %c1 = arith.constant 1 : index
    %16 = memref.load %arg1[%c0_13, %c1] : memref<1x3xf32, #tpu.memory_space<smem>>
    %c0_14 = arith.constant 0 : index
    %c2 = arith.constant 2 : index
    %17 = memref.load %arg1[%c0_14, %c2] : memref<1x3xf32, #tpu.memory_space<smem>>
    %18 = math.tanh %13 : vector<1x256xf32>
    %19 = vector.broadcast %15 : f32 to vector<1x256xf32>
    %20 = arith.mulf %18, %19 : vector<1x256xf32>
    %21 = vector.broadcast %16 : f32 to vector<1x256xf32>
    %22 = arith.addf %20, %21 : vector<1x256xf32>
    %c0_15 = arith.constant 0 : index
    %c0_16 = arith.constant 0 : index
    %23 = vector.load %arg3[%c0_15, %c0_16] : memref<4x1xf32, #tpu.memory_space<vmem>>, vector<4x1xf32>
    %24 = vector.broadcast %22 : vector<1x256xf32> to vector<4x256xf32>
    %25 = vector.broadcast %23 : vector<4x1xf32> to vector<4x256xf32>
    %26 = arith.mulf %24, %25 : vector<4x256xf32>
    %27 = math.exp %26 : vector<4x256xf32>
    %28 = arith.mulf %0, %27 : vector<4x256xf32>
    %29 = vector.broadcast %14 : vector<1x256xf32> to vector<4x256xf32>
    %30 = vector.broadcast %23 : vector<4x1xf32> to vector<4x256xf32>
    %31 = arith.mulf %29, %30 : vector<4x256xf32>
    %32 = arith.addf %28, %31 : vector<4x256xf32>
    %c0_17 = arith.constant 0 : index
    %c0_18 = arith.constant 0 : index
    %33 = vector.load %arg8[%c0_17, %c0_18] : memref<4x256xf32, #tpu.memory_space<vmem>>, vector<4x256xf32>
    tpu.vector_store %arg8[%c0_17, %c0_18], %32 {strides = array<i32>} : memref<4x256xf32, #tpu.memory_space<vmem>>, vector<4x256xf32>,
    %34 = vector.broadcast %17 : f32 to vector<1x256xf32>
    %35 = arith.mulf %22, %34 : vector<1x256xf32>
    %c0_19 = arith.constant 0 : index
    %c0_20 = arith.constant 0 : index
    %36 = vector.load %arg9[%c0_19, %c0_20] : memref<1x256xf32, #tpu.memory_space<vmem>>, vector<1x256xf32>
    tpu.vector_store %arg9[%c0_19, %c0_20], %35 {strides = array<i32>} : memref<1x256xf32, #tpu.memory_space<vmem>>, vector<1x256xf32>,
    return
  }
  func.func @transform_0(%arg0: i32) -> (i32, i32) {
    %c0_i32 = arith.constant 0 : i32
    %c0_i32_0 = arith.constant 0 : i32
    %c0_i32_1 = arith.constant 0 : i32
    return %c0_i32, %c0_i32_0 : i32, i32
  }
  func.func @transform_1(%arg0: i32) -> (i32, i32) {
    %c0_i32 = arith.constant 0 : i32
    %c0_i32_0 = arith.constant 0 : i32
    return %c0_i32, %arg0 : i32, i32
  }
  func.func @transform_2(%arg0: i32) -> (i32, i32) {
    %c0_i32 = arith.constant 0 : i32
    %c0_i32_0 = arith.constant 0 : i32
    %c0_i32_1 = arith.constant 0 : i32
    return %c0_i32, %c0_i32_0 : i32, i32
  }
  func.func @transform_3(%arg0: i32) -> (i32, i32) {
    %c0_i32 = arith.constant 0 : i32
    %c0_i32_0 = arith.constant 0 : i32
    %c0_i32_1 = arith.constant 0 : i32
    return %c0_i32, %c0_i32_0 : i32, i32
  }
  func.func @transform_4(%arg0: i32) -> (i32, i32) {
    %c0_i32 = arith.constant 0 : i32
    %c0_i32_0 = arith.constant 0 : i32
    %c0_i32_1 = arith.constant 0 : i32
    return %c0_i32, %c0_i32_0 : i32, i32
  }
  func.func @transform_5(%arg0: i32) -> (i32, i32) {
    %c0_i32 = arith.constant 0 : i32
    %c0_i32_0 = arith.constant 0 : i32
    %c0_i32_1 = arith.constant 0 : i32
    return %c0_i32, %c0_i32_0 : i32, i32
  }
  func.func @transform_6(%arg0: i32) -> (i32, i32) {
    %c0_i32 = arith.constant 0 : i32
    %c0_i32_0 = arith.constant 0 : i32
    %c0_i32_1 = arith.constant 0 : i32
    return %c0_i32, %c0_i32_0 : i32, i32
  }
  func.func @transform_7(%arg0: i32) -> (i32, i32) {
    %c0_i32 = arith.constant 0 : i32
    %c0_i32_0 = arith.constant 0 : i32
    return %c0_i32, %arg0 : i32, i32
  }
  func.func @transform_8(%arg0: i32) -> (i32, i32) {
    %c0_i32 = arith.constant 0 : i32
    %c0_i32_0 = arith.constant 0 : i32
    return %c0_i32, %arg0 : i32, i32
  }
}

</mosaic_0001>

<llo_original>
// kernel: tpu_custom_call.1
$region0: #{tpu_custom_call.1}
  #allocation0 [shape = 'u32[]', space=smem, size = 0x4, offset = 0x4, fixed_abs, tag = 'smem constant byte address 0x4 - core index']
  #allocation1 [shape = 'u32[144,128]{1,0:T(1,128)}', space=vmem, size = 0x12000, scoped, tag = 'internal scratch']
  %s0 = inlined_call_operand.vmem [shape: f32[1,3], index: 0, kind: input, shape index: {}]
  %s1 = inlined_call_operand.vmem [shape: f32[4,1024], index: 1, kind: input, shape index: {}]
  %s2 = inlined_call_operand.vmem [shape: f32[4,1], index: 2, kind: input, shape index: {}]
  %s3 = inlined_call_operand.vmem [shape: f32[32,4], index: 3, kind: input, shape index: {}]
  %s4 = inlined_call_operand.vmem [shape: f32[32,1], index: 4, kind: input, shape index: {}]
  %s5 = inlined_call_operand.vmem [shape: f32[2,32], index: 5, kind: input, shape index: {}]
  %s6 = inlined_call_operand.vmem [shape: f32[2,1], index: 6, kind: input, shape index: {}]
  %s7 = inlined_call_operand.hbm [shape: f32[4,1024], index: 7, kind: output, shape index: {0}]
  %s8 = inlined_call_operand.hbm [shape: f32[1,1024], index: 8, kind: output, shape index: {1}]
  %9 = xla_tuple %s7, %s8
  %s10 = sld [smem:[#allocation0]]
  $region73: #{tpu_custom_call.1} parent=0
    _
  %s12 = ssub.s32 1, %s10
  %s13 = scalar_select 0, %s12, %s10
  $region1: #{tpu_custom_call.1} parent=0
    #allocation2 [shape = 'u8[512]{0}', space=smem, size = 0x200, scoped, tag = 'input window, operand 0, single buffered']
    #allocation3 [shape = 's32[2]{0}', space=sflag, size = 0x8, scoped, tag = 'scoped memory for tpu_custom_call.1']
    #allocation4 [shape = 's32[2]{0}', space=sflag, size = 0x8, scoped, tag = 'scoped memory for tpu_custom_call.1']
    #allocation5 [shape = 'u8[8192]{0}', space=vmem, size = 0x2000, scoped, tag = 'output window, operand 0']
    #allocation6 [shape = 'u8[2048]{0}', space=vmem, size = 0x800, scoped, tag = 'output window, operand 1']
    #allocation7 [shape = 's32[2]{0}', space=sflag, size = 0x8, scoped, tag = 'scoped memory for tpu_custom_call.1']
    %14 = vsyncpa [#allocation4], 0
    %15 = vsyncpa [#allocation3], 0
    %s16 = scalar_lea.sflag [#allocation3], 1
    %17 = vsyncpa %s16, 0
    %18 = vsyncpa [#allocation7], 0
    %s19 = scalar_lea.sflag [#allocation7], 1
    %20 = vsyncpa %s19, 0
    loop: start=0, step=1, limit=6
    $region2: #{tpu_custom_call.1} parent=1 // loop_pre_header
      _
    $region3: #{tpu_custom_call.1} parent=1 // loop_header
      %s22 = sphi 0, %s26
      %p23 = scmp.ge.s32.totalorder %s22, 6
      %s30 = sphi 0, %s30
      %s32 = sphi 0, %s30
      %s33 = sphi 0, %s32
      %s47 = sphi 0, %s33
      %s53 = sphi 0, %s55
      %s56 = sphi 0, %s53
      %s57 = sphi 0, %s56
      %s73 = sphi 0, %s57
      %s77 = sphi 0, %s77
      %s79 = sphi 0, %s77
      %s80 = sphi 0, %s79
      %s94 = sphi 0, %s80
      %s98 = sphi 0, %s98
      %s100 = sphi 0, %s98
      %s101 = sphi 0, %s100
      %s115 = sphi 0, %s101
      %s119 = sphi 0, %s119
      %s121 = sphi 0, %s119
      %s122 = sphi 0, %s121
      %s136 = sphi 0, %s122
      %s140 = sphi 0, %s140
      %s142 = sphi 0, %s140
      %s143 = sphi 0, %s142
      %s157 = sphi 0, %s143
      %s161 = sphi 0, %s161
      %s163 = sphi 0, %s161
      %s164 = sphi 0, %s163
      %s178 = sphi 0, %s164
      %s184 = sphi 0, %s186
      %s187 = sphi 0, %s184
      %s188 = sphi 0, %s187
      %s204 = sphi 0, %s188
      %s210 = sphi 0, %s212
      %s213 = sphi 0, %s210
      %s214 = sphi 0, %s213
      %s230 = sphi 0, %s214
    $region4: #{tpu_custom_call.1} parent=1 // loop_header_branch
      %25 = sbr.rel (%p23) target = $region8
    $region5: #{tpu_custom_call.1} parent=1 // loop_body
      %s27 = ssub.s32 %s22, 1
      %s28 = ssub.s32 %s22, 2
      %s29 = sadd.s32 %s22, 1
      %s31 = sadd.s32 %s30, 1
      %p34 = scmp.eq.s32.totalorder %s22, 3
      %p35 = scmp.ne.s32.totalorder %s30, %s32
      %p36 = scmp.eq.s32.totalorder %s22, 0
      %p37 = por %p35, %p36
      %p38 = scmp.ne.s32.totalorder %s30, %s32
      %p39 = scmp.eq.s32.totalorder %s27, 3
      %p40 = por %p38, %p39
      %p41 = scmp.ne.s32.totalorder %s32, %s33
      %p42 = scmp.eq.s32.totalorder %s27, 0
      %p43 = por %p41, %p42
      %p44 = scmp.ne.s32.totalorder %s32, %s33
      %p45 = scmp.eq.s32.totalorder %s28, 3
      %p46 = por %p44, %p45
      %p48 = scmp.ne.s32.totalorder %s33, %s47
      %p49 = scmp.eq.s32.totalorder %s28, 0
      %p50 = por %p48, %p49
      %s51 = ssub.s32 %s22, %s29
      %p52 = scmp.eq.s32.totalorder %s51, 0
      %s54 = sadd.s32 %s53, 1
      %s55 = scalar_select %p52, %s53, %s54
      %p58 = pneg %p52
      %p59 = scmp.eq.s32.totalorder %s22, 3
      %p60 = por %p58, %p59
      %p61 = scmp.ne.s32.totalorder %s53, %s56
      %p62 = scmp.eq.s32.totalorder %s22, 0
      %p63 = por %p61, %p62
      %p64 = scmp.ne.s32.totalorder %s53, %s56
      %p65 = scmp.eq.s32.totalorder %s27, 3
      %p66 = por %p64, %p65
      %p67 = scmp.ne.s32.totalorder %s56, %s57
      %p68 = scmp.eq.s32.totalorder %s27, 0
      %p69 = por %p67, %p68
      %p70 = scmp.ne.s32.totalorder %s56, %s57
      %p71 = scmp.eq.s32.totalorder %s28, 3
      %p72 = por %p70, %p71
      %p74 = scmp.ne.s32.totalorder %s57, %s73
      %p75 = scmp.eq.s32.totalorder %s28, 0
      %p76 = por %p74, %p75
      %s78 = sadd.s32 %s77, 1
      %p81 = scmp.eq.s32.totalorder %s22, 3
      %p82 = scmp.ne.s32.totalorder %s77, %s79
      %p83 = scmp.eq.s32.totalorder %s22, 0
      %p84 = por %p82, %p83
      %p85 = scmp.ne.s32.totalorder %s77, %s79
      %p86 = scmp.eq.s32.totalorder %s27, 3
      %p87 = por %p85, %p86
      %p88 = scmp.ne.s32.totalorder %s79, %s80
      %p89 = scmp.eq.s32.totalorder %s27, 0
      %p90 = por %p88, %p89
      %p91 = scmp.ne.s32.totalorder %s79, %s80
      %p92 = scmp.eq.s32.totalorder %s28, 3
      %p93 = por %p91, %p92
      %p95 = scmp.ne.s32.totalorder %s80, %s94
      %p96 = scmp.eq.s32.totalorder %s28, 0
      %p97 = por %p95, %p96
      %s99 = sadd.s32 %s98, 1
      %p102 = scmp.eq.s32.totalorder %s22, 3
      %p103 = scmp.ne.s32.totalorder %s98, %s100
      %p104 = scmp.eq.s32.totalorder %s22, 0
      %p105 = por %p103, %p104
      %p106 = scmp.ne.s32.totalorder %s98, %s100
      %p107 = scmp.eq.s32.totalorder %s27, 3
      %p108 = por %p106, %p107
      %p109 = scmp.ne.s32.totalorder %s100, %s101
      %p110 = scmp.eq.s32.totalorder %s27, 0
      %p111 = por %p109, %p110
      %p112 = scmp.ne.s32.totalorder %s100, %s101
      %p113 = scmp.eq.s32.totalorder %s28, 3
      %p114 = por %p112, %p113
      %p116 = scmp.ne.s32.totalorder %s101, %s115
      %p117 = scmp.eq.s32.totalorder %s28, 0
      %p118 = por %p116, %p117
      %s120 = sadd.s32 %s119, 1
      %p123 = scmp.eq.s32.totalorder %s22, 3
      %p124 = scmp.ne.s32.totalorder %s119, %s121
      %p125 = scmp.eq.s32.totalorder %s22, 0
      %p126 = por %p124, %p125
      %p127 = scmp.ne.s32.totalorder %s119, %s121
      %p128 = scmp.eq.s32.totalorder %s27, 3
      %p129 = por %p127, %p128
      %p130 = scmp.ne.s32.totalorder %s121, %s122
      %p131 = scmp.eq.s32.totalorder %s27, 0
      %p132 = por %p130, %p131
      %p133 = scmp.ne.s32.totalorder %s121, %s122
      %p134 = scmp.eq.s32.totalorder %s28, 3
      %p135 = por %p133, %p134
      %p137 = scmp.ne.s32.totalorder %s122, %s136
      %p138 = scmp.eq.s32.totalorder %s28, 0
      %p139 = por %p137, %p138
      %s141 = sadd.s32 %s140, 1
      %p144 = scmp.eq.s32.totalorder %s22, 3
      %p145 = scmp.ne.s32.totalorder %s140, %s142
      %p146 = scmp.eq.s32.totalorder %s22, 0
      %p147 = por %p145, %p146
      %p148 = scmp.ne.s32.totalorder %s140, %s142
      %p149 = scmp.eq.s32.totalorder %s27, 3
      %p150 = por %p148, %p149
      %p151 = scmp.ne.s32.totalorder %s142, %s143
      %p152 = scmp.eq.s32.totalorder %s27, 0
      %p153 = por %p151, %p152
      %p154 = scmp.ne.s32.totalorder %s142, %s143
      %p155 = scmp.eq.s32.totalorder %s28, 3
      %p156 = por %p154, %p155
      %p158 = scmp.ne.s32.totalorder %s143, %s157
      %p159 = scmp.eq.s32.totalorder %s28, 0
      %p160 = por %p158, %p159
      %s162 = sadd.s32 %s161, 1
      %p165 = scmp.eq.s32.totalorder %s22, 3
      %p166 = scmp.ne.s32.totalorder %s161, %s163
      %p167 = scmp.eq.s32.totalorder %s22, 0
      %p168 = por %p166, %p167
      %p169 = scmp.ne.s32.totalorder %s161, %s163
      %p170 = scmp.eq.s32.totalorder %s27, 3
      %p171 = por %p169, %p170
      %p172 = scmp.ne.s32.totalorder %s163, %s164
      %p173 = scmp.eq.s32.totalorder %s27, 0
      %p174 = por %p172, %p173
      %p175 = scmp.ne.s32.totalorder %s163, %s164
      %p176 = scmp.eq.s32.totalorder %s28, 3
      %p177 = por %p175, %p176
      %p179 = scmp.ne.s32.totalorder %s164, %s178
      %p180 = scmp.eq.s32.totalorder %s28, 0
      %p181 = por %p179, %p180
      %s182 = ssub.s32 %s22, %s29
      %p183 = scmp.eq.s32.totalorder %s182, 0
      %s185 = sadd.s32 %s184, 1
      %s186 = scalar_select %p183, %s184, %s185
      %p189 = pneg %p183
      %p190 = scmp.eq.s32.totalorder %s22, 3
      %p191 = por %p189, %p190
      %p192 = scmp.ne.s32.totalorder %s184, %s187
      %p193 = scmp.eq.s32.totalorder %s22, 0
      %p194 = por %p192, %p193
      %p195 = scmp.ne.s32.totalorder %s184, %s187
      %p196 = scmp.eq.s32.totalorder %s27, 3
      %p197 = por %p195, %p196
      %p198 = scmp.ne.s32.totalorder %s187, %s188
      %p199 = scmp.eq.s32.totalorder %s27, 0
      %p200 = por %p198, %p199
      %p201 = scmp.ne.s32.totalorder %s187, %s188
      %p202 = scmp.eq.s32.totalorder %s28, 3
      %p203 = por %p201, %p202
      %p205 = scmp.ne.s32.totalorder %s188, %s204
      %p206 = scmp.eq.s32.totalorder %s28, 0
      %p207 = por %p205, %p206
      %s208 = ssub.s32 %s22, %s29
      %p209 = scmp.eq.s32.totalorder %s208, 0
      %s211 = sadd.s32 %s210, 1
      %s212 = scalar_select %p209, %s210, %s211
      %p215 = pneg %p209
      %p216 = scmp.eq.s32.totalorder %s22, 3
      %p217 = por %p215, %p216
      %p218 = scmp.ne.s32.totalorder %s210, %s213
      %p219 = scmp.eq.s32.totalorder %s22, 0
      %p220 = por %p218, %p219
      %p221 = scmp.ne.s32.totalorder %s210, %s213
      %p222 = scmp.eq.s32.totalorder %s27, 3
      %p223 = por %p221, %p222
      %p224 = scmp.ne.s32.totalorder %s213, %s214
      %p225 = scmp.eq.s32.totalorder %s27, 0
      %p226 = por %p224, %p225
      %p227 = scmp.ne.s32.totalorder %s213, %s214
      %p228 = scmp.eq.s32.totalorder %s28, 3
      %p229 = por %p227, %p228
      %p231 = scmp.ne.s32.totalorder %s214, %s230
      %p232 = scmp.eq.s32.totalorder %s28, 0
      %p233 = por %p231, %p232
      %p234 = scmp.le.s32.totalorder 1, %s22
      %p235 = scmp.lt.s32.totalorder %s22, 5
      %p236 = pnand %p234, %p235
      %p237 = pneg %p236
      // Predicated region
      $region9: #{tpu_custom_call.1} parent=5 // pred_check
        _
      $region10: #{tpu_custom_call.1} parent=5 // pred_check_branch
        %239 = sbr.rel (%p236) target = $region12
      $region11: #{tpu_custom_call.1} parent=5 // pred_region
        %s240 = ssub.s32 %s22, 1
        // Predicated region
        $region13: #{tpu_custom_call.1} parent=11 // pred_check
          %p241 = pneg %p43
        $region14: #{tpu_custom_call.1} parent=11 // pred_check_branch
          %243 = sbr.rel (%p241) target = $region16
        $region15: #{tpu_custom_call.1} parent=11 // pred_region
          %s245 = ssub.s32 16, 16
          %246 = vsyncadd [#allocation4], %s245
          %s248 = sshll.u32 %s0, 4
          %s249 = int_to_ptr.vmem [resolvable:$true] %s248
          %251 = dma.vmem_to_smem %s249, 16, [#allocation2], [#allocation4]
        $region16: #{tpu_custom_call.1} parent=11 // pred_fallthru
          _
        // Predicated region
        $region17: #{tpu_custom_call.1} parent=11 // pred_check
          %p252 = pneg %p90
        $region18: #{tpu_custom_call.1} parent=11 // pred_check_branch
          %254 = sbr.rel (%p252) target = $region20
        $region19: #{tpu_custom_call.1} parent=11 // pred_region
          _
        $region20: #{tpu_custom_call.1} parent=11 // pred_fallthru
          _
        // Predicated region
        $region21: #{tpu_custom_call.1} parent=11 // pred_check
          %p255 = pneg %p111
        $region22: #{tpu_custom_call.1} parent=11 // pred_check_branch
          %257 = sbr.rel (%p255) target = $region24
        $region23: #{tpu_custom_call.1} parent=11 // pred_region
          _
        $region24: #{tpu_custom_call.1} parent=11 // pred_fallthru
          _
        // Predicated region
        $region25: #{tpu_custom_call.1} parent=11 // pred_check
          %p258 = pneg %p132
        $region26: #{tpu_custom_call.1} parent=11 // pred_check_branch
          %260 = sbr.rel (%p258) target = $region28
        $region27: #{tpu_custom_call.1} parent=11 // pred_region
          _
        $region28: #{tpu_custom_call.1} parent=11 // pred_fallthru
          _
        // Predicated region
        $region29: #{tpu_custom_call.1} parent=11 // pred_check
          %p261 = pneg %p153
        $region30: #{tpu_custom_call.1} parent=11 // pred_check_branch
          %263 = sbr.rel (%p261) target = $region32
        $region31: #{tpu_custom_call.1} parent=11 // pred_region
          _
        $region32: #{tpu_custom_call.1} parent=11 // pred_fallthru
          _
        // Predicated region
        $region33: #{tpu_custom_call.1} parent=11 // pred_check
          %p264 = pneg %p174
        $region34: #{tpu_custom_call.1} parent=11 // pred_check_branch
          %266 = sbr.rel (%p264) target = $region36
        $region35: #{tpu_custom_call.1} parent=11 // pred_region
          _
        $region36: #{tpu_custom_call.1} parent=11 // pred_fallthru
          _
      $region12: #{tpu_custom_call.1} parent=5 // pred_fallthru
        _
      %p267 = scmp.lt.s32.totalorder %s22, 4
      // Predicated region
      $region37: #{tpu_custom_call.1} parent=5 // pred_check
        %p268 = pneg %p267
      $region38: #{tpu_custom_call.1} parent=5 // pred_check_branch
        %270 = sbr.rel (%p268) target = $region40
      $region39: #{tpu_custom_call.1} parent=5 // pred_region
        // Predicated region
        $region41: #{tpu_custom_call.1} parent=39 // pred_check
          %p271 = pneg %p63
        $region42: #{tpu_custom_call.1} parent=39 // pred_check_branch
          %273 = sbr.rel (%p271) target = $region44
        $region43: #{tpu_custom_call.1} parent=39 // pred_region
          %s274 = smul.u32 2, %s22
          %p275 = scmp.lt.s32.totalorder %s274, 7
          %s276 = scalar_select %p275, %s274, 7
          %s277 = smul.addr %s276, 4
          %s278 = scalar_lea.vmem %s1, %s277
          %s279 = smul.u32 2, %s22
        $region44: #{tpu_custom_call.1} parent=39 // pred_fallthru
          _
      $region40: #{tpu_custom_call.1} parent=5 // pred_fallthru
        _
      %p280 = scmp.le.s32.totalorder 1, %s22
      %p281 = scmp.lt.s32.totalorder %s22, 5
      %p282 = pnand %p280, %p281
      %p283 = pneg %p282
      // Predicated region
      $region45: #{tpu_custom_call.1} parent=5 // pred_check
        _
      $region46: #{tpu_custom_call.1} parent=5 // pred_check_branch
        %285 = sbr.rel (%p282) target = $region48
      $region47: #{tpu_custom_call.1} parent=5 // pred_region
        %s286 = ssub.s32 %s22, 1
        // Predicated region
        $region49: #{tpu_custom_call.1} parent=47 // pred_check
          %p287 = pneg %p43
        $region50: #{tpu_custom_call.1} parent=47 // pred_check_branch
          %289 = sbr.rel (%p287) target = $region52
        $region51: #{tpu_custom_call.1} parent=47 // pred_region
          %290 = dma.done [#allocation4], 16
        $region52: #{tpu_custom_call.1} parent=47 // pred_fallthru
          _
        %291 = sfence
        %p292 = pneg %p43
        %p293 = pneg %p40
        %s294 = smul.u32 2, %s27
        %p295 = scmp.lt.s32.totalorder %s294, 7
        %s296 = scalar_select %p295, %s294, 7
        %s297 = smul.addr %s296, 4
        %s298 = scalar_lea.vmem %s1, %s297
        %p299 = pneg %p69
        %p300 = pneg %p66
        %p301 = pneg %p90
        %p302 = pneg %p87
        %p303 = pneg %p111
        %p304 = pneg %p108
        %p305 = pneg %p132
        %p306 = pneg %p129
        %p307 = pneg %p153
        %p308 = pneg %p150
        %p309 = pneg %p174
        %p310 = pneg %p171
        %p311 = pneg %p200
        %p312 = pneg %p197
        %s313 = sand.u32 %s187, 1
        %s314 = scalar_lea.sflag [#allocation3], %s313
        %s315 = sand.u32 %s187, 1
        %s316 = smul.addr %s315, 8
        %s317 = scalar_lea.vmem [#allocation5], %s316
        %p318 = pneg %p226
        %p319 = pneg %p223
        %s320 = sand.u32 %s213, 1
        %s321 = scalar_lea.sflag [#allocation7], %s320
        %s322 = sand.u32 %s213, 1
        %s323 = smul.addr %s322, 2
        %s324 = scalar_lea.vmem [#allocation6], %s323
        %s325 = smul.u32 2, %s27
        %p326 = scmp.lt.s32.totalorder %s325, 7
        %s327 = scalar_select %p326, %s325, 7
        %s328 = smul.addr %s327, 4
        %s329 = scalar_lea.vmem %s1, %s328
        %s330 = smul.u32 2, %s27
        %s331 = smul.u32 2, %s27
        %s332 = smul.u32 2, %s27
        %v333 = vld [vmem:[%s329] sm:$0xff]
        %v334 = vld [vmem:[%s3] sm:$0xff]
        %v335 = vld [vmem:[%s3 + $0x8] sm:$0xff]
        %v336 = vld [vmem:[%s3 + $0x10] sm:$0xff]
        %v337 = vld [vmem:[%s3 + $0x18] sm:$0xff]
        %v338 = vld [vmem:[%s4] sm:$0xff]
        %v339 = vld [vmem:[%s4 + $0x8] sm:$0xff]
        %v340 = vld [vmem:[%s4 + $0x10] sm:$0xff]
        %v341 = vld [vmem:[%s4 + $0x18] sm:$0xff]
        %343 = vset.pattern.permute.xlu0 0
        %344 = vperm.xlu0 %343, %v338
        %v345 = vpop.permute.xlu0 %344
        %348 = vset.pattern.permute.xlu0 0
        %349 = vperm.xlu0 %348, %v339
        %v350 = vpop.permute.xlu0 %349
        %353 = vset.pattern.permute.xlu0 0
        %354 = vperm.xlu0 %353, %v340
        %v355 = vpop.permute.xlu0 %354
        %358 = vset.pattern.permute.xlu0 0
        %359 = vperm.xlu0 %358, %v341
        %v360 = vpop.permute.xlu0 %359
        %v363 = vcombine.high %v333, %v333
        %vm364 = vcmask 31744
        %v366 = vsel %vm364, %v334, 0
        %v369 = vsel %vm364, %v335, 0
        %v372 = vsel %vm364, %v336, 0
        %v375 = vsel %vm364, %v337, 0
        %vm377 = vcmask 1043456
        %v378 = vsel %vm377, %v333, 0
        %v380 = vsel %vm377, %v363, 0
        %382 = vmatprep.subr.mxu0 0.0
        %383 = vmatpush1.msra.mxu0 0.0
        %384 = vmatprep.subr.mxu0 0.0
        %385 = vmatpush1.msra.mxu0 0.0
        %386 = vmatprep.subr.mxu0 0.0
        %387 = vmatpush1.msra.mxu0 0.0
        %388 = vmatprep.subr.mxu0 0.0
        %389 = vmatpush1.msra.mxu0 0.0
        %390 = vmatprep.subr.mxu0 0.0
        %391 = vmatpush1.msra.mxu0 0.0
        %392 = vmatprep.subr.mxu0 0.0
        %393 = vmatpush1.msra.mxu0 0.0
        %394 = vmatprep.subr.mxu0 0.0
        %395 = vmatpush1.msra.mxu0 0.0
        %396 = vmatprep.subr.mxu0 0.0
        %397 = vmatpush1.msra.mxu0 0.0
        %398 = vmatprep.subr.mxu0 0.0
        %399 = vmatpush1.msra.mxu0 0.0
        %400 = vmatprep.subr.mxu0 0.0
        %401 = vmatpush1.msra.mxu0 0.0
        %402 = vmatprep.subr.mxu0 0.0
        %403 = vmatpush1.msra.mxu0 0.0
        %404 = vmatprep.subr.mxu0 0.0
        %405 = vmatpush1.msra.mxu0 0.0
        %406 = vmatprep.subr.mxu0 0.0
        %407 = vmatpush1.msra.mxu0 0.0
        %408 = vmatprep.subr.mxu0 0.0
        %409 = vmatpush1.msra.mxu0 0.0
        %410 = vmatprep.subr.mxu0 0.0
        %411 = vmatpush1.msra.mxu0 0.0
        %412 = vmatprep.subr.mxu0 %v380
        %413 = vmatpush1.msra.mxu0 %v378
        %414 = vmatprep.subr.mxu0 0.0
        %415 = vmatpush2.msra.mxu0 0.0
        %416 = vmatprep.subr.mxu0 0.0
        %417 = vmatpush2.msra.mxu0 0.0
        %418 = vmatprep.subr.mxu0 0.0
        %419 = vmatpush2.msra.mxu0 0.0
        %420 = vmatprep.subr.mxu0 0.0
        %421 = vmatpush2.msra.mxu0 0.0
        %422 = vmatprep.subr.mxu0 0.0
        %423 = vmatpush2.msra.mxu0 0.0
        %424 = vmatprep.subr.mxu0 0.0
        %425 = vmatpush2.msra.mxu0 0.0
        %426 = vmatprep.subr.mxu0 0.0
        %427 = vmatpush2.msra.mxu0 0.0
        %428 = vmatprep.subr.mxu0 0.0
        %429 = vmatpush2.msra.mxu0 0.0
        %430 = vmatprep.subr.mxu0 0.0
        %431 = vmatpush2.msra.mxu0 0.0
        %432 = vmatprep.subr.mxu0 0.0
        %433 = vmatpush2.msra.mxu0 0.0
        %434 = vmatprep.subr.mxu0 0.0
        %435 = vmatpush2.msra.mxu0 0.0
        %436 = vmatprep.subr.mxu0 0.0
        %437 = vmatpush2.msra.mxu0 0.0
        %438 = vmatprep.subr.mxu0 0.0
        %439 = vmatpush2.msra.mxu0 0.0
        %440 = vmatprep.subr.mxu0 0.0
        %441 = vmatpush2.msra.mxu0 0.0
        %442 = vmatprep.subr.mxu0 0.0
        %443 = vmatpush2.msra.mxu0 0.0
        %444 = vmatprep.subr.mxu0 0.0
        %445 = vmatpush2.msra.mxu0 0.0
        %446 = vmatprep.mubr.f32.mxu0 0.0
        %447 = vmatmul.mubr.f32.gmra.mxu0 %v366
        %v448 = vpop.f32.mrf.mxu0
        %v449 = vadd.f32 %v345, %v448
        %v450 = vpop.f32.mrf.mxu0
        %v451 = vadd.f32 %v345, %v450
        %452 = vmatprep.mubr.f32.mxu0 0.0
        %453 = vmatmul.mubr.f32.gmra.mxu0 %v369
        %v454 = vpop.f32.mrf.mxu0
        %v455 = vadd.f32 %v350, %v454
        %v456 = vpop.f32.mrf.mxu0
        %v457 = vadd.f32 %v350, %v456
        %458 = vmatprep.mubr.f32.mxu0 0.0
        %459 = vmatmul.mubr.f32.gmra.mxu0 %v372
        %v460 = vpop.f32.mrf.mxu0
        %v461 = vadd.f32 %v355, %v460
        %v462 = vpop.f32.mrf.mxu0
        %v463 = vadd.f32 %v355, %v462
        %464 = vmatprep.mubr.f32.mxu0 0.0
        %465 = vmatmul.mubr.f32.gmra.mxu0 %v375
        %v466 = vpop.f32.mrf.mxu0
        %v467 = vadd.f32 %v360, %v466
        %v468 = vpop.f32.mrf.mxu0
        %v469 = vadd.f32 %v360, %v468
        %470 = vdwg.mxu0
        %v471 = vmax.f32 %v449, 0.0
        %v472 = vmax.f32 %v451, 0.0
        %v473 = vmax.f32 %v455, 0.0
        %v474 = vmax.f32 %v457, 0.0
        %v475 = vmax.f32 %v461, 0.0
        %v476 = vmax.f32 %v463, 0.0
        %v477 = vmax.f32 %v467, 0.0
        %v478 = vmax.f32 %v469, 0.0
        %v479 = vld [vmem:[%s5] sm:$0x3]
        %v480 = vld [vmem:[%s6] sm:$0x3]
        %482 = vset.pattern.permute.xlu0 0
        %483 = vperm.xlu0 %482, %v480
        %v484 = vpop.permute.xlu0 %483
        %vm486 = vcmask 261120
        %v488 = vsel %vm486, %v479, 0
        %490 = vmatprep.subr.mxu0 0.0
        %491 = vmatpush1.msra.mxu0 0.0
        %492 = vmatprep.subr.mxu0 0.0
        %493 = vmatpush1.msra.mxu0 0.0
        %494 = vmatprep.subr.mxu0 0.0
        %495 = vmatpush1.msra.mxu0 0.0
        %496 = vmatprep.subr.mxu0 0.0
        %497 = vmatpush1.msra.mxu0 0.0
        %498 = vmatprep.subr.mxu0 0.0
        %499 = vmatpush1.msra.mxu0 0.0
        %500 = vmatprep.subr.mxu0 0.0
        %501 = vmatpush1.msra.mxu0 0.0
        %502 = vmatprep.subr.mxu0 0.0
        %503 = vmatpush1.msra.mxu0 0.0
        %504 = vmatprep.subr.mxu0 0.0
        %505 = vmatpush1.msra.mxu0 0.0
        %506 = vmatprep.subr.mxu0 0.0
        %507 = vmatpush1.msra.mxu0 0.0
        %508 = vmatprep.subr.mxu0 0.0
        %509 = vmatpush1.msra.mxu0 0.0
        %510 = vmatprep.subr.mxu0 0.0
        %511 = vmatpush1.msra.mxu0 0.0
        %512 = vmatprep.subr.mxu0 0.0
        %513 = vmatpush1.msra.mxu0 0.0
        %514 = vmatprep.subr.mxu0 %v478
        %515 = vmatpush1.msra.mxu0 %v477
        %516 = vmatprep.subr.mxu0 %v476
        %517 = vmatpush1.msra.mxu0 %v475
        %518 = vmatprep.subr.mxu0 %v474
        %519 = vmatpush1.msra.mxu0 %v473
        %520 = vmatprep.subr.mxu0 %v472
        %521 = vmatpush1.msra.mxu0 %v471
        %522 = vmatprep.subr.mxu0 0.0
        %523 = vmatpush2.msra.mxu0 0.0
        %524 = vmatprep.subr.mxu0 0.0
        %525 = vmatpush2.msra.mxu0 0.0
        %526 = vmatprep.subr.mxu0 0.0
        %527 = vmatpush2.msra.mxu0 0.0
        %528 = vmatprep.subr.mxu0 0.0
        %529 = vmatpush2.msra.mxu0 0.0
        %530 = vmatprep.subr.mxu0 0.0
        %531 = vmatpush2.msra.mxu0 0.0
        %532 = vmatprep.subr.mxu0 0.0
        %533 = vmatpush2.msra.mxu0 0.0
        %534 = vmatprep.subr.mxu0 0.0
        %535 = vmatpush2.msra.mxu0 0.0
        %536 = vmatprep.subr.mxu0 0.0
        %537 = vmatpush2.msra.mxu0 0.0
        %538 = vmatprep.subr.mxu0 0.0
        %539 = vmatpush2.msra.mxu0 0.0
        %540 = vmatprep.subr.mxu0 0.0
        %541 = vmatpush2.msra.mxu0 0.0
        %542 = vmatprep.subr.mxu0 0.0
        %543 = vmatpush2.msra.mxu0 0.0
        %544 = vmatprep.subr.mxu0 0.0
        %545 = vmatpush2.msra.mxu0 0.0
        %546 = vmatprep.subr.mxu0 0.0
        %547 = vmatpush2.msra.mxu0 0.0
        %548 = vmatprep.subr.mxu0 0.0
        %549 = vmatpush2.msra.mxu0 0.0
        %550 = vmatprep.subr.mxu0 0.0
        %551 = vmatpush2.msra.mxu0 0.0
        %552 = vmatprep.subr.mxu0 0.0
        %553 = vmatpush2.msra.mxu0 0.0
        %554 = vmatprep.mubr.f32.mxu0 0.0
        %555 = vmatmul.mubr.f32.gmra.mxu0 %v488
        %v556 = vpop.f32.mrf.mxu0
        %v557 = vadd.f32 %v484, %v556
        %v558 = vpop.f32.mrf.mxu0
        %v559 = vadd.f32 %v484, %v558
        %560 = vdwg.mxu0
        %s561 = sld [smem:[#allocation2]]
        %s562 = sld [smem:[#allocation2 + $0x1]]
        %s563 = sld [smem:[#allocation2 + $0x2]]
        %v564 = vtanh.pop %v557
        %v565 = vtanh.pop %v559
        %v566 = vstv %s561
        %v567 = vmul.f32 %v564, %v566
        %v568 = vmul.f32 %v565, %v566
        %v569 = vstv %s562
        %v570 = vadd.f32 %v567, %v569
        %v571 = vadd.f32 %v568, %v569
        %v572 = vld [vmem:[%s2] sm:$0xf]
        %v573 = vlaneseq
        %v574 = vshrl.u32 %v573, 7
        %v575 = vsub.s32 0, %v574
        %v576 = vrot.slane %v570, %v575
        %v577 = vlaneseq
        %v578 = vshrl.u32 %v577, 7
        %v579 = vsub.s32 0, %v578
        %v580 = vrot.slane %v571, %v579
        %582 = vset.pattern.permute.xlu0 0
        %583 = vperm.xlu0 %582, %v572
        %v584 = vpop.permute.xlu0 %583
        %v586 = vmul.f32 %v576, %v584
        %v587 = vmul.f32 %v580, %v584
        %v588 = vmul.f32 %v586, 1.442695
        %v589 = vpow.pop %v588
        %v590 = vmul.f32 %v587, 1.442695
        %v591 = vpow.pop %v590
        %v594 = vcombine.low %v589, %v591
        %v596 = vmul.f32 %v333, %v594
        %v597 = vlaneseq
        %v598 = vshrl.u32 %v597, 7
        %v599 = vsub.s32 1, %v598
        %v600 = vrot.slane %v557, %v599
        %v601 = vlaneseq
        %v602 = vshrl.u32 %v601, 7
        %v603 = vsub.s32 1, %v602
        %v604 = vrot.slane %v559, %v603
        %v605 = vmul.f32 %v600, %v584
        %v606 = vmul.f32 %v604, %v584
        %v609 = vcombine.low %v605, %v606
        %v611 = vadd.f32 %v596, %v609
        %612 = vst [vmem:[%s317] sm:$0xff] %v611
        %v613 = vstv %s563
        %v614 = vmul.f32 %v570, %v613
        %v615 = vmul.f32 %v571, %v613
        %v618 = vcombine.low %v614, %v615
        %v620 = vunpack.c.l.s4 1966171168
        %v621 = vunpack.c.0.s8 %v620
        %v622 = vlaneseq
        %v623 = vshrl.u32 %v622, 7
        %v624 = vsub.s32 %v621, %v623
        %v625 = vrot.slane %v618, %v624
        %v627 = vunpack.c.l.s4 1966171168
        %v628 = vunpack.c.0.s8 %v627
        %v629 = vlaneseq
        %v630 = vshrl.u32 %v629, 7
        %v631 = vsub.s32 %v628, %v630
        %v632 = vrot.slane %v625, %v631
        %v634 = vlaneseq
        %vm635 = vcmp.ge.s32.totalorder %v634, 0
        %vm636 = vcmp.lt.s32.totalorder %v634, 256
        %vm637 = vmand %vm635, %vm636
        %638 = vst.msk [vmem:[%s324] sm:$0x3] %vm637, %v632
        %s639 = sand.u32 %s187, 1
        %s640 = scalar_lea.sflag [#allocation3], %s639
        %s641 = sand.u32 %s187, 1
        %s642 = smul.addr %s641, 8
        %s643 = scalar_lea.vmem [#allocation5], %s642
        %s644 = sand.u32 %s213, 1
        %s645 = scalar_lea.sflag [#allocation7], %s644
        %s646 = sand.u32 %s213, 1
        %s647 = smul.addr %s646, 2
        %s648 = scalar_lea.vmem [#allocation6], %s647
        // Predicated region
        $region53: #{tpu_custom_call.1} parent=47 // pred_check
          %p649 = pneg %p197
        $region54: #{tpu_custom_call.1} parent=47 // pred_check_branch
          %651 = sbr.rel (%p649) target = $region56
        $region55: #{tpu_custom_call.1} parent=47 // pred_region
          %s652 = smul.u32 2, %s27
          %s654 = ssub.s32 128, 128
          %655 = vsyncadd %s640, %s654
          %s656 = smul.addr %s652, 64
          %s657 = scalar_lea.hbm %s7, %s656
          %s659 = sshll.u32 %s643, 4
          %s660 = int_to_ptr.vmem [resolvable:$true] %s659
          %662 = dma.vmem_to_hbm [thread:$0]  %s660, 128, %s657, %s640
        $region56: #{tpu_custom_call.1} parent=47 // pred_fallthru
          _
        // Predicated region
        $region57: #{tpu_custom_call.1} parent=47 // pred_check
          %p663 = pneg %p223
        $region58: #{tpu_custom_call.1} parent=47 // pred_check_branch
          %665 = sbr.rel (%p663) target = $region60
        $region59: #{tpu_custom_call.1} parent=47 // pred_region
          %s666 = smul.u32 2, %s27
          %s668 = ssub.s32 32, 32
          %669 = vsyncadd %s645, %s668
          %s670 = smul.addr %s666, 16
          %s671 = scalar_lea.hbm %s8, %s670
          %s673 = sshll.u32 %s648, 4
          %s674 = int_to_ptr.vmem [resolvable:$true] %s673
          %676 = dma.vmem_to_hbm [thread:$0]  %s674, 32, %s671, %s645
        $region60: #{tpu_custom_call.1} parent=47 // pred_fallthru
          _
      $region48: #{tpu_custom_call.1} parent=5 // pred_fallthru
        _
      %p677 = scmp.le.s32.totalorder 2, %s22
      // Predicated region
      $region61: #{tpu_custom_call.1} parent=5 // pred_check
        %p678 = pneg %p677
      $region62: #{tpu_custom_call.1} parent=5 // pred_check_branch
        %680 = sbr.rel (%p678) target = $region64
      $region63: #{tpu_custom_call.1} parent=5 // pred_region
        %s681 = ssub.s32 %s22, 2
        // Predicated region
        $region65: #{tpu_custom_call.1} parent=63 // pred_check
          %p682 = pneg %p203
        $region66: #{tpu_custom_call.1} parent=63 // pred_check_branch
          %684 = sbr.rel (%p682) target = $region68
        $region67: #{tpu_custom_call.1} parent=63 // pred_region
          %s685 = sand.u32 %s188, 1
          %s686 = scalar_lea.sflag [#allocation3], %s685
          %s687 = sand.u32 %s188, 1
          %s688 = smul.addr %s687, 8
          %s689 = scalar_lea.vmem [#allocation5], %s688
          %690 = dma.done %s686, 128
        $region68: #{tpu_custom_call.1} parent=63 // pred_fallthru
          _
        // Predicated region
        $region69: #{tpu_custom_call.1} parent=63 // pred_check
          %p691 = pneg %p229
        $region70: #{tpu_custom_call.1} parent=63 // pred_check_branch
          %693 = sbr.rel (%p691) target = $region72
        $region71: #{tpu_custom_call.1} parent=63 // pred_region
          %s694 = sand.u32 %s214, 1
          %s695 = scalar_lea.sflag [#allocation7], %s694
          %s696 = sand.u32 %s214, 1
          %s697 = smul.addr %s696, 2
          %s698 = scalar_lea.vmem [#allocation6], %s697
          %699 = dma.done %s695, 32
        $region72: #{tpu_custom_call.1} parent=63 // pred_fallthru
          _
      $region64: #{tpu_custom_call.1} parent=5 // pred_fallthru
        _
    $region6: #{tpu_custom_call.1} parent=1 // loop_footer
      %s26 = sadd.s32 1, %s22
    $region7: #{tpu_custom_call.1} parent=1 // loop_footer_branch
      %21 = sbr.rel target = $region3
    $region8: #{tpu_custom_call.1} parent=1 // loop_exit
      _
    %700 = vsyncpa [#allocation3], 1
    %s701 = scalar_lea.sflag [#allocation3], 1
    %702 = vsyncpa %s701, 1
    %703 = vsyncpa [#allocation7], 1
    %s704 = scalar_lea.sflag [#allocation7], 1
    %705 = vsyncpa %s704, 1
    %706 = vsyncpa [#allocation4], 1
    %s707 = scalar_lea.sflag [#allocation4], 1
    %708 = vsyncpa %s707, 1

</llo_original>
